<compile_context>
chip_gen: v6e
topology: v6e:2x2x1
jax: 0.10.0
libtpu: 0.0.40
codegen_flags: <defaults>
</compile_context>

<pallas_src>
import jax
import jax.numpy as jnp
import numpy as np
from jax.experimental import pallas as pl
from jax.experimental.pallas import tpu as pltpu


def _chunked_hypernet_kernel(x_ref, w_ref, b_ref, g_ref, out_ref):
    # x_ref:   (TB, D_in)        bf16   batch tile (re-streamed, tiny)
    # w_ref:   (1, D_in, DcT)    bf16   this chunk's projection-weight block
    # b_ref:   (1, 1, DcT)       f32    this chunk's projection-bias block
    # g_ref:   (1, TB, 1)        f32    precomputed sigmoid(gate(x))[:, c]
    # out_ref: (TB, DcT)                (B, C*Dc) output slab block
    proj = jnp.dot(x_ref[...], w_ref[0],
                   preferred_element_type=jnp.float32)          # (TB, DcT) f32, MXU
    proj = proj + b_ref[0].astype(jnp.float32)                  # (1, DcT) broadcast
    out_ref[...] = (proj * g_ref[0]).astype(out_ref.dtype)      # (TB, 1) gate broadcast


def _vmem_limit_bytes():
    """Per-generation VMEM budget: 3/4 of physical, capped at 100 MiB.
    v6e/v5e (128 MiB) -> ~96 MiB; v7x (64 MiB) -> 48 MiB; fallback 48 MiB."""
    try:
        cap = int(pltpu.get_tpu_info().vmem_capacity_bytes)
    except Exception:
        cap = 64 * 1024 * 1024
    return int(min(cap * 3 // 4, 100 * 1024 * 1024))


def _pick_dc_tile(d_in, dc_pad, max_block_bytes):
    """Largest multiple-of-128 divisor of dc_pad whose bf16 (D_in, DcT) weight
    block fits the per-block byte budget."""
    units = dc_pad // 128
    best = 128
    for k in range(1, units + 1):
        if units % k == 0 and d_in * (128 * k) * 2 <= max_block_bytes:
            best = 128 * k
    return best


def chunked_hypernetwork(x, params, *, batch_tile=None, out_dtype=None):
    """x: (B, D_in).  Returns (B, C, Dc), matching the PyTorch module.

    Note: output defaults to x.dtype (bf16 here) after f32 accumulation; the
    PyTorch module returns f32 -- pass out_dtype=jnp.float32 for bit-closer output.
    """
    B, D_in = x.shape
    proj_wT = params["proj_wT"]                         # (C, D_in, Dc) bf16
    proj_b = params["proj_b"]                           # (C, Dc)       f32
    gate_w = params["gate_w"]                           # (C, D_in)     f32
    gate_b = params["gate_b"]                           # (C,)          f32
    C, _, Dc = proj_wT.shape
    out_dtype = out_dtype if out_dtype is not None else x.dtype

    # --- gate precompute: one small f32 matmul for ALL chunks (wrapper-side) ---
    gate = jax.nn.sigmoid(
        x.astype(jnp.float32) @ gate_w.astype(jnp.float32).T
        + gate_b.astype(jnp.float32))                   # (B, C) f32

    # --- pad Dc to a lane-dense multiple of 128 ---
    Dc_pad = ((Dc + 127) // 128) * 128
    if Dc_pad != Dc:
        proj_wT = jnp.pad(proj_wT, ((0, 0), (0, 0), (0, Dc_pad - Dc)))
        proj_b = jnp.pad(proj_b, ((0, 0), (0, Dc_pad - Dc)))

    # --- batch tile (multiple of 8, capped at 256) + batch padding ---
    if batch_tile is None:
        batch_tile = min(256, ((B + 7) // 8) * 8)
    assert batch_tile % 8 == 0
    B_pad = ((B + batch_tile - 1) // batch_tile) * batch_tile
    if B_pad != B:
        x = jnp.pad(x, ((0, B_pad - B), (0, 0)))
        gate = jnp.pad(gate, ((0, B_pad - B), (0, 0)))
    n_bt = B_pad // batch_tile

    # chunk-major gate so the kernel's per-chunk block is (1, TB, 1)
    gate3 = gate.T.reshape(C, B_pad, 1)                 # (C, B_pad, 1) f32
    proj_b3 = proj_b.reshape(C, 1, Dc_pad)              # (C, 1, Dc_pad)

    # --- per-generation VMEM budget and Dc tiling ---
    vmem_limit = _vmem_limit_bytes()
    dc_tile = _pick_dc_tile(D_in, Dc_pad, max_block_bytes=vmem_limit // 4)
    n_dc = Dc_pad // dc_tile

    out = pl.pallas_call(
        _chunked_hypernet_kernel,
        out_shape=jax.ShapeDtypeStruct((B_pad, C * Dc_pad), out_dtype),
        grid_spec=pltpu.PrefetchScalarGridSpec(
            num_scalar_prefetch=0,
            # batch innermost -> each weight block is fetched from HBM exactly once
            grid=(C, n_dc, n_bt),
            in_specs=[
                pl.BlockSpec((batch_tile, D_in), lambda c, j, i: (i, 0)),      # x
                pl.BlockSpec((1, D_in, dc_tile), lambda c, j, i: (c, 0, j)),   # proj W^T
                pl.BlockSpec((1, 1, dc_tile), lambda c, j, i: (c, 0, j)),      # proj bias
                pl.BlockSpec((1, batch_tile, 1), lambda c, j, i: (c, i, 0)),   # gate
            ],
            out_specs=pl.BlockSpec((batch_tile, dc_tile),
                                   lambda c, j, i: (i, c * n_dc + j)),
        ),
        compiler_params=pltpu.CompilerParams(
            # batch axis "arbitrary" biases the megacore split to the chunk/Dc
            # axes so the two TCs (v7x) stream disjoint weight halves.
            dimension_semantics=("parallel", "parallel", "arbitrary"),
            vmem_limit_bytes=vmem_limit,
        ),
    )(x, proj_wT, proj_b3, gate3)

    # (B_pad, C*Dc_pad) -> (B_pad, C, Dc_pad) is a contiguous reshape (no copy)
    out = out.reshape(B_pad, C, Dc_pad)
    if B_pad != B:
        out = out[:B]
    if Dc_pad != Dc:
        out = out[:, :, :Dc]
    return out


def init_params(key, input_dim, num_chunks, intermediate_dim, output_dim):
    """Deterministic init. nn.Linear projection weights stored pre-transposed
    as (in, out) and in bf16 (MXU inputs); biases and gate params stay f32."""
    chunk_dim = intermediate_dim * output_dim // num_chunks
    k1, k2, k3, k4 = jax.random.split(key, 4)
    scale = 0.02
    proj_wT = (scale * jax.random.normal(
        k1, (num_chunks, input_dim, chunk_dim), jnp.float32)).astype(jnp.bfloat16)
    proj_b = scale * jax.random.normal(k2, (num_chunks, chunk_dim), jnp.float32)
    gate_w = scale * jax.random.normal(k3, (num_chunks, input_dim), jnp.float32)
    gate_b = scale * jax.random.normal(k4, (num_chunks,), jnp.float32)
    # TODO(synk): orthogonal_init only changes initialization (torch.nn.init.orthogonal_);
    # forward math is identical, so it is not reproduced here.
    return dict(proj_wT=proj_wT, proj_b=proj_b, gate_w=gate_w, gate_b=gate_b)


def reference(x, p):
    """Pure-JAX fp32 reference of the same forward math."""
    x32 = x.astype(jnp.float32)
    w = p["proj_wT"].astype(jnp.float32)                 # (C, D_in, Dc)
    b = p["proj_b"].astype(jnp.float32)                  # (C, Dc)
    proj = jnp.einsum("bd,cde->bce", x32, w) + b[None]   # (B, C, Dc)
    gate = jax.nn.sigmoid(x32 @ p["gate_w"].astype(jnp.float32).T
                          + p["gate_b"].astype(jnp.float32))   # (B, C)
    return proj * gate[:, :, None]


if __name__ == "__main__":
    # small shapes consistent with the module:
    #   batch=8, input_dim=64, num_chunks=4, intermediate_dim=16, output_dim=32
    #   -> chunk_dim = 16*32//4 = 128 (lane-dense output last dim)
    B, D_IN, C, I_DIM, O_DIM = 8, 64, 4, 16, 32

    key = jax.random.PRNGKey(0)
    kp, kx = jax.random.split(key, 2)
    params = init_params(kp, D_IN, C, I_DIM, O_DIM)
    x = jax.random.normal(kx, (B, D_IN), jnp.float32).astype(jnp.bfloat16)

    out = chunked_hypernetwork(x, params)
    out = jax.block_until_ready(out)

    ref = reference(x, params)
    np.testing.assert_allclose(np.asarray(out, dtype=np.float32),
                               np.asarray(ref, dtype=np.float32),
                               atol=1e-2, rtol=2e-2)

    # TODO(synk): `num_heads` is an unused constructor argument in the PyTorch module
    # (it does not affect forward) and is therefore ignored here.
    print("KERNEL_OK")
</pallas_src>

<mosaic_0001>
module attributes {stable_mosaic.version = 11 : i64} {
  func.func @_chunked_hypernet_kernel(%arg0: i32, %arg1: i32, %arg2: i32, %arg3: memref<8x64xbf16, #tpu.memory_space<vmem>>, %arg4: memref<1x64x128xbf16, #tpu.memory_space<vmem>>, %arg5: memref<1x1x128xf32, #tpu.memory_space<vmem>>, %arg6: memref<1x8x1xf32, #tpu.memory_space<vmem>>, %arg7: memref<8x128xbf16, #tpu.memory_space<vmem>>) attributes {dimension_semantics = [#tpu.dimension_semantics<parallel>, #tpu.dimension_semantics<parallel>, #tpu.dimension_semantics<arbitrary>], iteration_bounds = array<i64: 4, 1, 1>, scalar_prefetch = 0 : i64, scratch_operands = 0 : i64, tpu.core_type = #tpu.core_type<tc>, window_params = [{transform_indices = @transform_0, window_bounds = array<i64: 8, 64>}, {transform_indices = @transform_1, window_bounds = array<i64: 1, 64, 128>}, {transform_indices = @transform_2, window_bounds = array<i64: 1, 1, 128>}, {transform_indices = @transform_3, window_bounds = array<i64: 1, 8, 1>}, {transform_indices = @transform_4, window_bounds = array<i64: 8, 128>}]} {
    %c0 = arith.constant 0 : index
    %c0_0 = arith.constant 0 : index
    %0 = vector.load %arg3[%c0, %c0_0] : memref<8x64xbf16, #tpu.memory_space<vmem>>, vector<8x64xbf16>
    %c0_1 = arith.constant 0 : index
    %c0_2 = arith.constant 0 : index
    %c0_3 = arith.constant 0 : index
    %1 = vector.load %arg4[%c0_1, %c0_2, %c0_3] : memref<1x64x128xbf16, #tpu.memory_space<vmem>>, vector<1x64x128xbf16>
    %2 = vector.shape_cast %1 : vector<1x64x128xbf16> to vector<64x128xbf16>
    %cst = arith.constant dense<0.000000e+00> : vector<8x128xf32>
    %3 = tpu.matmul %0, %2, %cst {dimension_numbers = #tpu.dot_dimension_numbers<[1], [0], [0], [1], [0, 0, 1, 1], [], []>} : vector<8x64xbf16>, vector<64x128xbf16>, vector<8x128xf32> -> vector<8x128xf32>
    %c0_4 = arith.constant 0 : index
    %c0_5 = arith.constant 0 : index
    %c0_6 = arith.constant 0 : index
    %4 = vector.load %arg5[%c0_4, %c0_5, %c0_6] : memref<1x1x128xf32, #tpu.memory_space<vmem>>, vector<1x1x128xf32>
    %5 = vector.shape_cast %4 : vector<1x1x128xf32> to vector<1x128xf32>
    %6 = vector.broadcast %5 : vector<1x128xf32> to vector<8x128xf32>
    %7 = arith.addf %3, %6 : vector<8x128xf32>
    %c0_7 = arith.constant 0 : index
    %c0_8 = arith.constant 0 : index
    %c0_9 = arith.constant 0 : index
    %8 = vector.load %arg6[%c0_7, %c0_8, %c0_9] : memref<1x8x1xf32, #tpu.memory_space<vmem>>, vector<1x8x1xf32>
    %9 = vector.shape_cast %8 : vector<1x8x1xf32> to vector<8x1xf32>
    %10 = vector.broadcast %9 : vector<8x1xf32> to vector<8x128xf32>
    %11 = arith.mulf %7, %10 : vector<8x128xf32>
    %12 = arith.truncf %11 : vector<8x128xf32> to vector<8x128xbf16>
    %c0_10 = arith.constant 0 : index
    %c0_11 = arith.constant 0 : index
    %13 = vector.load %arg7[%c0_10, %c0_11] : memref<8x128xbf16, #tpu.memory_space<vmem>>, vector<8x128xbf16>
    tpu.vector_store %arg7[%c0_10, %c0_11], %12 {strides = array<i32>} : memref<8x128xbf16, #tpu.memory_space<vmem>>, vector<8x128xbf16>,
    return
  }
  func.func @transform_0(%arg0: i32, %arg1: i32, %arg2: i32) -> (i32, i32) {
    %c0_i32 = arith.constant 0 : i32
    %c0_i32_0 = arith.constant 0 : i32
    return %arg2, %c0_i32 : i32, i32
  }
  func.func @transform_1(%arg0: i32, %arg1: i32, %arg2: i32) -> (i32, i32, i32) {
    %c0_i32 = arith.constant 0 : i32
    %c0_i32_0 = arith.constant 0 : i32
    return %arg0, %c0_i32, %arg1 : i32, i32, i32
  }
  func.func @transform_2(%arg0: i32, %arg1: i32, %arg2: i32) -> (i32, i32, i32) {
    %c0_i32 = arith.constant 0 : i32
    %c0_i32_0 = arith.constant 0 : i32
    return %arg0, %c0_i32, %arg1 : i32, i32, i32
  }
  func.func @transform_3(%arg0: i32, %arg1: i32, %arg2: i32) -> (i32, i32, i32) {
    %c0_i32 = arith.constant 0 : i32
    %c0_i32_0 = arith.constant 0 : i32
    return %arg0, %arg2, %c0_i32 : i32, i32, i32
  }
  func.func @transform_4(%arg0: i32, %arg1: i32, %arg2: i32) -> (i32, i32) {
    %c1_i32 = arith.constant 1 : i32
    %0 = arith.muli %arg0, %c1_i32 : i32
    %1 = arith.addi %0, %arg1 : i32
    %c0_i32 = arith.constant 0 : i32
    return %arg2, %1 : i32, i32
  }
}

</mosaic_0001>

<llo_original>
// kernel: tpu_custom_call.1
$region0: #{tpu_custom_call.1}
  #allocation0 [shape = 'u32[]', space=smem, size = 0x4, offset = 0x4, fixed_abs, tag = 'smem constant byte address 0x4 - core index']
  #allocation1 [shape = 'u32[144,128]{1,0:T(1,128)}', space=vmem, size = 0x12000, scoped, tag = 'internal scratch']
  %s0 = inlined_call_operand.vmem [shape: bf16[8,64], index: 0, kind: input, shape index: {}]
  %s1 = inlined_call_operand.hbm [shape: bf16[4,64,128], index: 1, kind: input, shape index: {}]
  %s2 = inlined_call_operand.vmem [shape: f32[4,1,128], index: 2, kind: input, shape index: {}]
  %s3 = inlined_call_operand.vmem [shape: f32[4,8,1], index: 3, kind: input, shape index: {}]
  %s4 = inlined_call_operand.hbm [shape: bf16[8,512], index: 4, kind: output, shape index: {}]
  %s5 = sld [smem:[#allocation0]]
  $region53: #{tpu_custom_call.1} parent=0
    _
  %s7 = ssub.s32 1, %s5
  %s8 = scalar_select 0, %s7, %s5
  $region1: #{tpu_custom_call.1} parent=0
    #allocation2 [shape = 'u8[32768]{0}', space=vmem, size = 0x8000, scoped, tag = 'input window, operand 1']
    #allocation3 [shape = 's32[2]{0}', space=sflag, size = 0x8, scoped, tag = 'scoped memory for tpu_custom_call.1']
    #allocation4 [shape = 's32[2]{0}', space=sflag, size = 0x8, scoped, tag = 'scoped memory for tpu_custom_call.1']
    #allocation5 [shape = 'u8[4096]{0}', space=vmem, size = 0x1000, scoped, tag = 'output window, operand 0']
    %9 = vsyncpa [#allocation3], 0
    %s10 = scalar_lea.sflag [#allocation3], 1
    %11 = vsyncpa %s10, 0
    %12 = vsyncpa [#allocation4], 0
    %s13 = scalar_lea.sflag [#allocation4], 1
    %14 = vsyncpa %s13, 0
    loop: start=0, step=1, limit=6
    $region2: #{tpu_custom_call.1} parent=1 // loop_pre_header
      _
    $region3: #{tpu_custom_call.1} parent=1 // loop_header
      %s16 = sphi 0, %s20
      %p17 = scmp.ge.s32.totalorder %s16, 6
      %s23 = sphi 0, %s42
      %s24 = sphi 0, %s38
      %s25 = sphi 0, %s34
      %s26 = sphi 0, %s23
      %s27 = sphi 0, %s24
      %s28 = sphi 0, %s25
      %s29 = sphi 0, %s26
      %s30 = sphi 0, %s27
      %s31 = sphi 0, %s28
      %s45 = sphi 0, %s47
      %s48 = sphi 0, %s45
      %s49 = sphi 0, %s48
      %s65 = sphi 0, %s49
      %s73 = sphi 0, %s75
      %s76 = sphi 0, %s73
      %s77 = sphi 0, %s76
      %s93 = sphi 0, %s77
      %s101 = sphi 0, %s103
      %s104 = sphi 0, %s101
      %s105 = sphi 0, %s104
      %s121 = sphi 0, %s105
      %s129 = sphi 0, %s131
      %s132 = sphi 0, %s129
      %s133 = sphi 0, %s132
      %s149 = sphi 0, %s133
      %s159 = sphi 0, %s161
      %s162 = sphi 0, %s159
      %s163 = sphi 0, %s162
      %s179 = sphi 0, %s163
    $region4: #{tpu_custom_call.1} parent=1 // loop_header_branch
      %19 = sbr.rel (%p17) target = $region8
    $region5: #{tpu_custom_call.1} parent=1 // loop_body
      %s21 = ssub.s32 %s16, 1
      %s22 = ssub.s32 %s16, 2
      %s32 = sadd.s32 1, %s25
      %p33 = scmp.ge.s32.totalorder %s32, 1
      %s34 = scalar_select %p33, 0, %s32
      %s35 = sadd.s32 1, %s24
      %s36 = scalar_select %p33, %s35, %s24
      %p37 = scmp.ge.s32.totalorder %s36, 1
      %s38 = scalar_select %p37, 0, %s36
      %s39 = sadd.s32 1, %s23
      %s40 = scalar_select %p37, %s39, %s23
      %p41 = scmp.ge.s32.totalorder %s40, 4
      %s42 = scalar_select %p41, 0, %s40
      %s43 = ssub.s32 %s25, %s34
      %p44 = scmp.eq.s32.totalorder %s43, 0
      %s46 = sadd.s32 %s45, 1
      %s47 = scalar_select %p44, %s45, %s46
      %p50 = pneg %p44
      %p51 = scmp.eq.s32.totalorder %s16, 3
      %p52 = por %p50, %p51
      %p53 = scmp.ne.s32.totalorder %s45, %s48
      %p54 = scmp.eq.s32.totalorder %s16, 0
      %p55 = por %p53, %p54
      %p56 = scmp.ne.s32.totalorder %s45, %s48
      %p57 = scmp.eq.s32.totalorder %s21, 3
      %p58 = por %p56, %p57
      %p59 = scmp.ne.s32.totalorder %s48, %s49
      %p60 = scmp.eq.s32.totalorder %s21, 0
      %p61 = por %p59, %p60
      %p62 = scmp.ne.s32.totalorder %s48, %s49
      %p63 = scmp.eq.s32.totalorder %s22, 3
      %p64 = por %p62, %p63
      %p66 = scmp.ne.s32.totalorder %s49, %s65
      %p67 = scmp.eq.s32.totalorder %s22, 0
      %p68 = por %p66, %p67
      %s69 = ssub.s32 %s23, %s42
      %s70 = ssub.s32 %s24, %s38
      %s71 = sor.u32 %s69, %s70
      %p72 = scmp.eq.s32.totalorder %s71, 0
      %s74 = sadd.s32 %s73, 1
      %s75 = scalar_select %p72, %s73, %s74
      %p78 = pneg %p72
      %p79 = scmp.eq.s32.totalorder %s16, 3
      %p80 = por %p78, %p79
      %p81 = scmp.ne.s32.totalorder %s73, %s76
      %p82 = scmp.eq.s32.totalorder %s16, 0
      %p83 = por %p81, %p82
      %p84 = scmp.ne.s32.totalorder %s73, %s76
      %p85 = scmp.eq.s32.totalorder %s21, 3
      %p86 = por %p84, %p85
      %p87 = scmp.ne.s32.totalorder %s76, %s77
      %p88 = scmp.eq.s32.totalorder %s21, 0
      %p89 = por %p87, %p88
      %p90 = scmp.ne.s32.totalorder %s76, %s77
      %p91 = scmp.eq.s32.totalorder %s22, 3
      %p92 = por %p90, %p91
      %p94 = scmp.ne.s32.totalorder %s77, %s93
      %p95 = scmp.eq.s32.totalorder %s22, 0
      %p96 = por %p94, %p95
      %s97 = ssub.s32 %s23, %s42
      %s98 = ssub.s32 %s24, %s38
      %s99 = sor.u32 %s97, %s98
      %p100 = scmp.eq.s32.totalorder %s99, 0
      %s102 = sadd.s32 %s101, 1
      %s103 = scalar_select %p100, %s101, %s102
      %p106 = pneg %p100
      %p107 = scmp.eq.s32.totalorder %s16, 3
      %p108 = por %p106, %p107
      %p109 = scmp.ne.s32.totalorder %s101, %s104
      %p110 = scmp.eq.s32.totalorder %s16, 0
      %p111 = por %p109, %p110
      %p112 = scmp.ne.s32.totalorder %s101, %s104
      %p113 = scmp.eq.s32.totalorder %s21, 3
      %p114 = por %p112, %p113
      %p115 = scmp.ne.s32.totalorder %s104, %s105
      %p116 = scmp.eq.s32.totalorder %s21, 0
      %p117 = por %p115, %p116
      %p118 = scmp.ne.s32.totalorder %s104, %s105
      %p119 = scmp.eq.s32.totalorder %s22, 3
      %p120 = por %p118, %p119
      %p122 = scmp.ne.s32.totalorder %s105, %s121
      %p123 = scmp.eq.s32.totalorder %s22, 0
      %p124 = por %p122, %p123
      %s125 = ssub.s32 %s23, %s42
      %s126 = ssub.s32 %s25, %s34
      %s127 = sor.u32 %s125, %s126
      %p128 = scmp.eq.s32.totalorder %s127, 0
      %s130 = sadd.s32 %s129, 1
      %s131 = scalar_select %p128, %s129, %s130
      %p134 = pneg %p128
      %p135 = scmp.eq.s32.totalorder %s16, 3
      %p136 = por %p134, %p135
      %p137 = scmp.ne.s32.totalorder %s129, %s132
      %p138 = scmp.eq.s32.totalorder %s16, 0
      %p139 = por %p137, %p138
      %p140 = scmp.ne.s32.totalorder %s129, %s132
      %p141 = scmp.eq.s32.totalorder %s21, 3
      %p142 = por %p140, %p141
      %p143 = scmp.ne.s32.totalorder %s132, %s133
      %p144 = scmp.eq.s32.totalorder %s21, 0
      %p145 = por %p143, %p144
      %p146 = scmp.ne.s32.totalorder %s132, %s133
      %p147 = scmp.eq.s32.totalorder %s22, 3
      %p148 = por %p146, %p147
      %p150 = scmp.ne.s32.totalorder %s133, %s149
      %p151 = scmp.eq.s32.totalorder %s22, 0
      %p152 = por %p150, %p151
      %s153 = sadd.s32 %s23, %s24
      %s154 = sadd.s32 %s42, %s38
      %s155 = ssub.s32 %s25, %s34
      %s156 = ssub.s32 %s153, %s154
      %s157 = sor.u32 %s155, %s156
      %p158 = scmp.eq.s32.totalorder %s157, 0
      %s160 = sadd.s32 %s159, 1
      %s161 = scalar_select %p158, %s159, %s160
      %p164 = pneg %p158
      %p165 = scmp.eq.s32.totalorder %s16, 3
      %p166 = por %p164, %p165
      %p167 = scmp.ne.s32.totalorder %s159, %s162
      %p168 = scmp.eq.s32.totalorder %s16, 0
      %p169 = por %p167, %p168
      %p170 = scmp.ne.s32.totalorder %s159, %s162
      %p171 = scmp.eq.s32.totalorder %s21, 3
      %p172 = por %p170, %p171
      %p173 = scmp.ne.s32.totalorder %s162, %s163
      %p174 = scmp.eq.s32.totalorder %s21, 0
      %p175 = por %p173, %p174
      %p176 = scmp.ne.s32.totalorder %s162, %s163
      %p177 = scmp.eq.s32.totalorder %s22, 3
      %p178 = por %p176, %p177
      %p180 = scmp.ne.s32.totalorder %s163, %s179
      %p181 = scmp.eq.s32.totalorder %s22, 0
      %p182 = por %p180, %p181
      %p183 = scmp.le.s32.totalorder 1, %s16
      %p184 = scmp.lt.s32.totalorder %s16, 5
      %p185 = pnand %p183, %p184
      %p186 = pneg %p185
      // Predicated region
      $region9: #{tpu_custom_call.1} parent=5 // pred_check
        _
      $region10: #{tpu_custom_call.1} parent=5 // pred_check_branch
        %188 = sbr.rel (%p185) target = $region12
      $region11: #{tpu_custom_call.1} parent=5 // pred_region
        %s189 = ssub.s32 %s16, 1
        // Predicated region
        $region13: #{tpu_custom_call.1} parent=11 // pred_check
          %p190 = pneg %p61
        $region14: #{tpu_custom_call.1} parent=11 // pred_check_branch
          %192 = sbr.rel (%p190) target = $region16
        $region15: #{tpu_custom_call.1} parent=11 // pred_region
          %p193 = scmp.lt.s32.totalorder %s28, 0
          %s194 = scalar_select %p193, %s28, 0
          %s195 = smul.addr %s194, 4
          %s196 = scalar_lea.vmem %s0, %s195
        $region16: #{tpu_custom_call.1} parent=11 // pred_fallthru
          _
      $region12: #{tpu_custom_call.1} parent=5 // pred_fallthru
        _
      %p197 = scmp.lt.s32.totalorder %s16, 4
      // Predicated region
      $region17: #{tpu_custom_call.1} parent=5 // pred_check
        %p198 = pneg %p197
      $region18: #{tpu_custom_call.1} parent=5 // pred_check_branch
        %200 = sbr.rel (%p198) target = $region20
      $region19: #{tpu_custom_call.1} parent=5 // pred_region
        // Predicated region
        $region21: #{tpu_custom_call.1} parent=19 // pred_check
          %p201 = pneg %p83
        $region22: #{tpu_custom_call.1} parent=19 // pred_check_branch
          %203 = sbr.rel (%p201) target = $region24
        $region23: #{tpu_custom_call.1} parent=19 // pred_region
          %s204 = sand.u32 %s73, 1
          %s205 = scalar_lea.sflag [#allocation3], %s204
          %s206 = sand.u32 %s73, 1
          %s207 = smul.addr %s206, 32
          %s208 = scalar_lea.vmem [#allocation2], %s207
          %s210 = ssub.s32 512, 512
          %211 = vsyncadd %s205, %s210
          %s212 = smul.addr %s23, 8
          %s213 = sadd.s32 %s24, %s212
          %s214 = smul.addr %s213, 64
          %s215 = scalar_lea.hbm %s1, %s214
          %s216 = sshll.u32 %s208, 4
          %s217 = int_to_ptr.vmem [resolvable:$true] %s216
          %222 = dma.hbm_to_vmem [thread:$0]  %s215, 512, %s217, %s205, 64, 64, 4
        $region24: #{tpu_custom_call.1} parent=19 // pred_fallthru
          _
        // Predicated region
        $region25: #{tpu_custom_call.1} parent=19 // pred_check
          %p223 = pneg %p111
        $region26: #{tpu_custom_call.1} parent=19 // pred_check_branch
          %225 = sbr.rel (%p223) target = $region28
        $region27: #{tpu_custom_call.1} parent=19 // pred_region
          %p226 = scmp.lt.s32.totalorder %s23, 3
          %s227 = scalar_select %p226, %s23, 3
          %p228 = scmp.lt.s32.totalorder %s24, 0
          %s229 = scalar_select %p228, %s24, 0
          %s230 = sadd.s32 %s229, %s227
          %s231 = scalar_lea.vmem %s2, %s230
        $region28: #{tpu_custom_call.1} parent=19 // pred_fallthru
          _
        // Predicated region
        $region29: #{tpu_custom_call.1} parent=19 // pred_check
          %p232 = pneg %p139
        $region30: #{tpu_custom_call.1} parent=19 // pred_check_branch
          %234 = sbr.rel (%p232) target = $region32
        $region31: #{tpu_custom_call.1} parent=19 // pred_region
          %p235 = scmp.lt.s32.totalorder %s23, 3
          %s236 = scalar_select %p235, %s23, 3
          %p237 = scmp.lt.s32.totalorder %s25, 0
          %s238 = scalar_select %p237, %s25, 0
          %s239 = sadd.s32 %s238, %s236
          %s240 = smul.addr %s239, 8
          %s241 = scalar_lea.vmem %s3, %s240
        $region32: #{tpu_custom_call.1} parent=19 // pred_fallthru
          _
      $region20: #{tpu_custom_call.1} parent=5 // pred_fallthru
        _
      %p242 = scmp.le.s32.totalorder 1, %s16
      %p243 = scmp.lt.s32.totalorder %s16, 5
      %p244 = pnand %p242, %p243
      %p245 = pneg %p244
      // Predicated region
      $region33: #{tpu_custom_call.1} parent=5 // pred_check
        _
      $region34: #{tpu_custom_call.1} parent=5 // pred_check_branch
        %247 = sbr.rel (%p244) target = $region36
      $region35: #{tpu_custom_call.1} parent=5 // pred_region
        %s248 = ssub.s32 %s16, 1
        %s249 = sand.u32 %s76, 1
        %s250 = scalar_lea.sflag [#allocation3], %s249
        %s251 = sand.u32 %s76, 1
        %s252 = smul.addr %s251, 32
        %s253 = scalar_lea.vmem [#allocation2], %s252
        // Predicated region
        $region37: #{tpu_custom_call.1} parent=35 // pred_check
          %p254 = pneg %p89
        $region38: #{tpu_custom_call.1} parent=35 // pred_check_branch
          %256 = sbr.rel (%p254) target = $region40
        $region39: #{tpu_custom_call.1} parent=35 // pred_region
          %257 = dma.done %s250, 512
        $region40: #{tpu_custom_call.1} parent=35 // pred_fallthru
          _
        %p258 = scmp.lt.s32.totalorder %s28, 0
        %s259 = scalar_select %p258, %s28, 0
        %s260 = smul.addr %s259, 4
        %s261 = scalar_lea.vmem %s0, %s260
        %p262 = pneg %p61
        %p263 = pneg %p58
        %s264 = sand.u32 %s76, 1
        %s265 = scalar_lea.sflag [#allocation3], %s264
        %s266 = sand.u32 %s76, 1
        %s267 = smul.addr %s266, 32
        %s268 = scalar_lea.vmem [#allocation2], %s267
        %p269 = pneg %p89
        %p270 = pneg %p86
        %p271 = scmp.lt.s32.totalorder %s26, 3
        %s272 = scalar_select %p271, %s26, 3
        %p273 = scmp.lt.s32.totalorder %s27, 0
        %s274 = scalar_select %p273, %s27, 0
        %s275 = sadd.s32 %s274, %s272
        %s276 = scalar_lea.vmem %s2, %s275
        %p277 = pneg %p117
        %p278 = pneg %p114
        %p279 = scmp.lt.s32.totalorder %s26, 3
        %s280 = scalar_select %p279, %s26, 3
        %p281 = scmp.lt.s32.totalorder %s28, 0
        %s282 = scalar_select %p281, %s28, 0
        %s283 = sadd.s32 %s282, %s280
        %s284 = smul.addr %s283, 8
        %s285 = scalar_lea.vmem %s3, %s284
        %p286 = pneg %p145
        %p287 = pneg %p142
        %p288 = pneg %p175
        %p289 = pneg %p172
        %s290 = sand.u32 %s162, 1
        %s291 = scalar_lea.sflag [#allocation4], %s290
        %s292 = sand.u32 %s162, 1
        %s293 = smul.addr %s292, 4
        %s294 = scalar_lea.vmem [#allocation5], %s293
        %p295 = scmp.lt.s32.totalorder %s28, 0
        %s296 = scalar_select %p295, %s28, 0
        %s297 = smul.addr %s296, 4
        %s298 = scalar_lea.vmem %s0, %s297
        %p299 = scmp.lt.s32.totalorder %s26, 3
        %s300 = scalar_select %p299, %s26, 3
        %p301 = scmp.lt.s32.totalorder %s27, 0
        %s302 = scalar_select %p301, %s27, 0
        %s303 = sadd.s32 %s302, %s300
        %s304 = scalar_lea.vmem %s2, %s303
        %p305 = scmp.lt.s32.totalorder %s26, 3
        %s306 = scalar_select %p305, %s26, 3
        %p307 = scmp.lt.s32.totalorder %s28, 0
        %s308 = scalar_select %p307, %s28, 0
        %s309 = sadd.s32 %s308, %s306
        %s310 = smul.addr %s309, 8
        %s311 = scalar_lea.vmem %s3, %s310
        %s312 = sadd.s32 %s26, %s27
        %v314 = vld [vmem:[%s298] sm:$0xf]
        %v315 = vld [vmem:[%s253] sm:$0xf]
        %v316 = vld [vmem:[%s253 + $0x4] sm:$0xf]
        %v317 = vld [vmem:[%s253 + $0x8] sm:$0xf]
        %v318 = vld [vmem:[%s253 + $0xc] sm:$0xf]
        %v319 = vld [vmem:[%s253 + $0x10] sm:$0xf]
        %v320 = vld [vmem:[%s253 + $0x14] sm:$0xf]
        %v321 = vld [vmem:[%s253 + $0x18] sm:$0xf]
        %v322 = vld [vmem:[%s253 + $0x1c] sm:$0xf]
        %v323 = vld [vmem:[%s304] sm:$0x1]
        %v325 = vlaneseq
        %v326 = vshrl.u32 %v325, 7
        %v327 = vsub.s32 0, %v326
        %v328 = vrot.slane %v323, %v327
        %v338 = vunpack.c.l.b16 %v315
        %v339 = vunpack.c.l.b16 %v316
        %v340 = vunpack.c.l.b16 %v317
        %v341 = vunpack.c.l.b16 %v318
        %v342 = vunpack.c.l.b16 %v319
        %v343 = vunpack.c.l.b16 %v320
        %v344 = vunpack.c.l.b16 %v321
        %v345 = vunpack.c.l.b16 %v322
        %v346 = vpack.c.b16 %v339, %v338
        %v347 = vpack.c.b16 %v341, %v340
        %v348 = vpack.c.b16 %v343, %v342
        %v349 = vpack.c.b16 %v345, %v344
        %vm354 = vcmask 523264
        %v356 = vsel %vm354, %v314, 0
        %358 = vmatprep.subr.bf16.mxu0 0
        %359 = vmatpush1.bf16.msra.mxu0 0
        %360 = vmatprep.subr.bf16.mxu0 0
        %361 = vmatpush1.bf16.msra.mxu0 0
        %362 = vmatprep.subr.bf16.mxu0 0
        %363 = vmatpush1.bf16.msra.mxu0 0
        %364 = vmatprep.subr.bf16.mxu0 0
        %365 = vmatpush1.bf16.msra.mxu0 0
        %366 = vmatprep.subr.bf16.mxu0 0
        %367 = vmatpush1.bf16.msra.mxu0 %v349
        %368 = vmatprep.subr.bf16.mxu0 0
        %369 = vmatpush1.bf16.msra.mxu0 %v348
        %370 = vmatprep.subr.bf16.mxu0 0
        %371 = vmatpush1.bf16.msra.mxu0 %v347
        %372 = vmatprep.subr.bf16.mxu0 0
        %373 = vmatpush1.bf16.msra.mxu0 %v346
        %374 = vmatprep.subr.bf16.mxu0 0
        %375 = vmatpush2.bf16.msra.mxu0 0
        %376 = vmatprep.subr.bf16.mxu0 0
        %377 = vmatpush2.bf16.msra.mxu0 0
        %378 = vmatprep.subr.bf16.mxu0 0
        %379 = vmatpush2.bf16.msra.mxu0 0
        %380 = vmatprep.subr.bf16.mxu0 0
        %381 = vmatpush2.bf16.msra.mxu0 0
        %382 = vmatprep.subr.bf16.mxu0 0
        %383 = vmatpush2.bf16.msra.mxu0 0
        %384 = vmatprep.subr.bf16.mxu0 0
        %385 = vmatpush2.bf16.msra.mxu0 0
        %386 = vmatprep.subr.bf16.mxu0 0
        %387 = vmatpush2.bf16.msra.mxu0 0
        %388 = vmatprep.subr.bf16.mxu0 0
        %389 = vmatpush2.bf16.msra.mxu0 0
        %390 = vmatprep.mubr.bf16.mxu0 0
        %391 = vmatmul.mubr.bf16.gmra.mxu0 %v356
        %v392 = vpop.f32.mrf.mxu0
        %v393 = vadd.f32 %v328, %v392
        %v394 = vpop.f32.mrf.mxu0
        %v395 = vpop.f32.mrf.mxu0
        %v396 = vpop.f32.mrf.mxu0
        %397 = vdwg.mxu0
        %v398 = vld [vmem:[%s311] sm:$0xff]
        %400 = vset.pattern.permute.xlu0 0
        %401 = vperm.xlu0 %400, %v398
        %v402 = vpop.permute.xlu0 %401
        %v404 = vmul.f32 %v393, %v402
        %v405 = vpack.c.bf16 %v404, %v404
        %406 = vst [vmem:[%s294] sm:$0xf] %v405
        %s407 = sand.u32 %s162, 1
        %s408 = scalar_lea.sflag [#allocation4], %s407
        %s409 = sand.u32 %s162, 1
        %s410 = smul.addr %s409, 4
        %s411 = scalar_lea.vmem [#allocation5], %s410
        // Predicated region
        $region41: #{tpu_custom_call.1} parent=35 // pred_check
          %p412 = pneg %p172
        $region42: #{tpu_custom_call.1} parent=35 // pred_check_branch
          %414 = sbr.rel (%p412) target = $region44
        $region43: #{tpu_custom_call.1} parent=35 // pred_region
          %s415 = sadd.s32 %s26, %s27
          %s417 = ssub.s32 64, 64
          %418 = vsyncadd %s408, %s417
          %s419 = smul.addr %s28, 4
          %s420 = sadd.s32 %s415, %s419
          %s421 = smul.addr %s420, 64
          %s422 = scalar_lea.hbm %s4, %s421
          %s424 = sshll.u32 %s411, 4
          %s425 = int_to_ptr.vmem [resolvable:$true] %s424
          %427 = dma.vmem_to_hbm [thread:$0]  %s425, 64, %s422, %s408
        $region44: #{tpu_custom_call.1} parent=35 // pred_fallthru
          _
      $region36: #{tpu_custom_call.1} parent=5 // pred_fallthru
        _
      %p428 = scmp.le.s32.totalorder 2, %s16
      // Predicated region
      $region45: #{tpu_custom_call.1} parent=5 // pred_check
        %p429 = pneg %p428
      $region46: #{tpu_custom_call.1} parent=5 // pred_check_branch
        %431 = sbr.rel (%p429) target = $region48
      $region47: #{tpu_custom_call.1} parent=5 // pred_region
        %s432 = ssub.s32 %s16, 2
        // Predicated region
        $region49: #{tpu_custom_call.1} parent=47 // pred_check
          %p433 = pneg %p178
        $region50: #{tpu_custom_call.1} parent=47 // pred_check_branch
          %435 = sbr.rel (%p433) target = $region52
        $region51: #{tpu_custom_call.1} parent=47 // pred_region
          %s436 = sand.u32 %s163, 1
          %s437 = scalar_lea.sflag [#allocation4], %s436
          %s438 = sand.u32 %s163, 1
          %s439 = smul.addr %s438, 4
          %s440 = scalar_lea.vmem [#allocation5], %s439
          %441 = dma.done %s437, 64
        $region52: #{tpu_custom_call.1} parent=47 // pred_fallthru
          _
      $region48: #{tpu_custom_call.1} parent=5 // pred_fallthru
        _
    $region6: #{tpu_custom_call.1} parent=1 // loop_footer
      %s20 = sadd.s32 1, %s16
    $region7: #{tpu_custom_call.1} parent=1 // loop_footer_branch
      %15 = sbr.rel target = $region3
    $region8: #{tpu_custom_call.1} parent=1 // loop_exit
      _
    %442 = vsyncpa [#allocation3], 1
    %s443 = scalar_lea.sflag [#allocation3], 1
    %444 = vsyncpa %s443, 1
    %445 = vsyncpa [#allocation4], 1
    %s446 = scalar_lea.sflag [#allocation4], 1
    %447 = vsyncpa %s446, 1

</llo_original>
